<compile_context>
chip_gen: v7x
topology: tpu7x:2x2x1
jax: 0.10.0
libtpu: 0.0.40
codegen_flags: <defaults>
</compile_context>

<pallas_src>
import functools

import jax
import jax.numpy as jnp
from jax import lax
from jax.experimental import pallas as pl
from jax.experimental.pallas import tpu as pltpu

LANE = 128
SUB = 8


def _dice_focal_kernel(x_ref, t_ref, inter_ref, union_ref, focal_ref, *,
                       gamma, eps, b, tr, ch, blocks_per_split, n_row_blocks,
                       vrows_last, needs_row_mask, has_oob):
    """One (b, tr, 128) tile of the flattened inputs.

    inter/union/focal refs are (1, b, 8, 128) partial-sum accumulators that
    stay VMEM-resident across the inner ("arbitrary") reduction axis.
    """
    s = pl.program_id(0)
    c = pl.program_id(1)
    g = s * blocks_per_split + c                    # logical row-block index

    @pl.when(c == 0)
    def _init():
        inter_ref[...] = jnp.zeros_like(inter_ref)
        union_ref[...] = jnp.zeros_like(union_ref)
        focal_ref[...] = jnp.zeros_like(focal_ref)

    def _reduce(v):                                 # (b, ch, 128) -> (b, 8, 128)
        # Free reshape (splits the sublane-spanning axis); pure VALU vreg adds.
        return jnp.sum(v.reshape(b, ch // SUB, SUB, LANE), axis=1)

    def _accum_chunk(x, t, focal_mask=None):
        x = x.astype(jnp.float32)
        t = t.astype(jnp.float32)
        prod = x * t
        sq = x * x + t * t                          # merged union accumulator
        xc = jnp.clip(x, eps, 1.0 - eps)
        one_m = 1.0 - xc
        log_xc = jnp.log(xc)
        log_1m = jnp.log(one_m)
        if gamma == 2.0:                            # fast path: VPU squaring
            pow_1m = one_m * one_m
            pow_xc = xc * xc
        elif gamma == 1.0:
            pow_1m = one_m
            pow_xc = xc
        else:                                       # reuse the logs, 2 EUP exps
            pow_1m = jnp.exp(gamma * log_1m)
            pow_xc = jnp.exp(gamma * log_xc)
        fa = pow_1m * log_xc
        fb = pow_xc * log_1m
        focal = fb + t * (fa - fb)                  # == t*fa + (1-t)*fb; negated in wrapper
        if focal_mask is not None:
            focal = jnp.where(focal_mask, focal, 0.0)
        inter_ref[0] += _reduce(prod)
        union_ref[0] += _reduce(sq)
        focal_ref[0] += _reduce(focal)

    n_chunks = tr // ch

    def _full_block():
        if n_chunks == 1:
            _accum_chunk(x_ref[...], t_ref[...])
        else:
            def body(j, carry):
                off = pl.multiple_of(j * ch, SUB)
                _accum_chunk(x_ref[:, pl.ds(off, ch), :],
                             t_ref[:, pl.ds(off, ch), :])
                return carry
            lax.fori_loop(0, n_chunks, body, 0)

    if not (needs_row_mask or has_oob):
        _full_block()
    else:
        full_cond = (g < n_row_blocks - 1) if needs_row_mask else (g < n_row_blocks)

        @pl.when(full_cond)
        def _full():
            _full_block()

        if needs_row_mask:
            # Only the final (partial) row-block ever pays for masking.
            @pl.when(g == n_row_blocks - 1)
            def _tail():
                n_full = vrows_last // ch           # static
                if n_full:
                    def body(j, carry):
                        off = pl.multiple_of(j * ch, SUB)
                        _accum_chunk(x_ref[:, pl.ds(off, ch), :],
                                     t_ref[:, pl.ds(off, ch), :])
                        return carry
                    lax.fori_loop(0, n_full, body, 0)
                rem = vrows_last - n_full * ch      # static
                if rem:
                    off = n_full * ch
                    row = lax.broadcasted_iota(jnp.int32, (b, ch, LANE), 1)
                    valid = row < rem
                    xm = jnp.where(
                        valid, x_ref[:, off:off + ch, :].astype(jnp.float32), 0.0)
                    tm = jnp.where(
                        valid, t_ref[:, off:off + ch, :].astype(jnp.float32), 0.0)
                    _accum_chunk(xm, tm, focal_mask=valid)


def _tpu_params():
    """(per-input block budget in bytes, number of TensorCores per device)."""
    kind = ""
    try:
        kind = jax.devices()[0].device_kind.lower()
    except Exception:
        pass
    mib = 1024 * 1024
    if "v6" in kind or "trillium" in kind:              # v6e: 1 TC, 128 MiB VMEM
        return 6 * mib, 1
    if "7x" in kind or "v7" in kind or "tpu7" in kind:  # v7x: 2 TC, 64 MiB VMEM
        return 6 * mib, 2
    if "v5 lite" in kind or "v5e" in kind or "v5lite" in kind:
        return 3 * mib, 1                               # v5e: 1 TC, memory-bound
    if "v5p" in kind or "v5" in kind or "v4" in kind:
        return 4 * mib, 2                               # megacore parts
    return 4 * mib, 1


def dice_and_focal_loss(inp, target, *, gamma=2.0):
    """Matches Dice_and_FocalLoss(gamma).forward(input, target)."""
    assert inp.shape == target.shape
    B = int(inp.shape[0])
    N = 1
    for d in inp.shape[1:]:
        N *= int(d)
    assert B > 0 and N > 0

    eps = 0.001
    gamma = float(gamma)
    itemsize = jnp.dtype(inp.dtype).itemsize
    block_budget, num_tc = _tpu_params()

    # 128-lane rows per sample.  If N is not a multiple of 128 a pad copy is
    # unavoidable (the (B, R, 128) reshape needs it); round the rows up to a
    # sublane multiple at the same time since the copy happens anyway.
    R = -(-N // LANE)
    if N % LANE:
        R = -(-R // SUB) * SUB

    # Chunk rows: bound the in-kernel f32 temporaries to ~0.5 MiB each.
    CH = max(SUB, (512 * 1024 // (B * LANE * 4)) // SUB * SUB)
    CH = min(CH, -(-R // SUB) * SUB)

    # Block rows: large DMA blocks (a multiple of CH), capped to the real data.
    TR = max(CH, (block_budget // (B * LANE * itemsize)) // CH * CH)
    TR = min(TR, -(-R // CH) * CH)

    n_row_blocks = -(-R // TR)
    num_splits = 2 if (num_tc >= 2 and n_row_blocks >= 2) else 1
    blocks_per_split = -(-n_row_blocks // num_splits)
    has_oob = (num_splits * blocks_per_split != n_row_blocks)
    needs_row_mask = (R % TR != 0)
    vrows_last = R - (n_row_blocks - 1) * TR

    # Flatten; pad only the sub-row lane remainder (never up to whole blocks).
    x2d = jnp.reshape(inp, (B, N))
    t2d = jnp.reshape(target, (B, N))
    pad = R * LANE - N
    if pad:
        # TODO(synk): stream the ragged tail with a manual DMA double-buffer
        # (memory_space=pl.ANY) instead of this wrapper-side zero-pad copy.
        x2d = jnp.pad(x2d, ((0, 0), (0, pad)))
        t2d = jnp.pad(t2d, ((0, 0), (0, pad)))
    x3 = x2d.reshape(B, R, LANE)
    t3 = t2d.reshape(B, R, LANE)

    # VMEM budget tied to the actual block / chunk sizes (2 inputs x 2 buffers
    # + in-kernel f32 temporaries + tiny accumulator/output slabs).
    block_bytes = B * TR * LANE * itemsize
    chunk_f32 = B * CH * LANE * 4
    out_bytes = 3 * num_splits * B * SUB * LANE * 4
    vmem_limit = int(min(60 * 1024 * 1024,
                         max(24 * 1024 * 1024,
                             4 * block_bytes + 14 * chunk_f32
                             + 2 * out_bytes + 2 * 1024 * 1024)))
    # TODO(synk): tile the batch dimension for very large B (>~256) so the
    # 8-row floor on CH/TR cannot overflow the VMEM budget.

    kernel = functools.partial(
        _dice_focal_kernel, gamma=gamma, eps=eps, b=B, tr=TR, ch=CH,
        blocks_per_split=blocks_per_split, n_row_blocks=n_row_blocks,
        vrows_last=vrows_last, needs_row_mask=needs_row_mask, has_oob=has_oob)

    bps, nrb = blocks_per_split, n_row_blocks
    in_spec = pl.BlockSpec(
        (B, TR, LANE), lambda s, c: (0, jnp.minimum(s * bps + c, nrb - 1), 0))
    out_spec = pl.BlockSpec((1, B, SUB, LANE), lambda s, c: (s, 0, 0, 0))
    out_shape = jax.ShapeDtypeStruct((num_splits, B, SUB, LANE), jnp.float32)

    inter_p, union_p, focal_p = pl.pallas_call(
        kernel,
        out_shape=(out_shape, out_shape, out_shape),
        grid_spec=pltpu.PrefetchScalarGridSpec(
            num_scalar_prefetch=0,
            grid=(num_splits, blocks_per_split),
            in_specs=[in_spec, in_spec],
            out_specs=[out_spec, out_spec, out_spec],
        ),
        compiler_params=pltpu.CompilerParams(
            dimension_semantics=("parallel", "arbitrary"),
            vmem_limit_bytes=vmem_limit),
    )(x3, t3)

    # ---- tiny final combine in plain JAX ------------------------------------
    smooth = 1.0
    intersect = jnp.sum(inter_p, axis=(0, 2, 3))                  # (B,)
    union = jnp.sum(union_p, axis=(0, 2, 3))                      # (B,)
    dice = jnp.mean(1.0 - (2.0 * intersect + smooth) / (union + smooth))

    focal_acc = jnp.sum(focal_p)             # sum of  b + t*(a-b)  (un-negated)
    if pad:
        # Analytic padding correction: padded elements have x = 0, t = 0, so
        # after the clamp (xc = eps) each contributes eps**gamma * log(1-eps).
        eps32 = jnp.float32(eps)
        if gamma == 2.0:
            pow_eps = eps32 * eps32
        elif gamma == 1.0:
            pow_eps = eps32
        else:
            pow_eps = jnp.exp(jnp.float32(gamma) * jnp.log(eps32))
        pad_const = pow_eps * jnp.log(jnp.float32(1.0) - eps32)
        focal_acc = focal_acc - jnp.float32(B * pad) * pad_const
    focal_mean = -focal_acc / jnp.float32(B * N)
    return dice + focal_mean


def _reference(inp, target, gamma=2.0):
    """Pure-JAX reference mirroring the PyTorch module."""
    inp = inp.astype(jnp.float32)
    target = target.astype(jnp.float32)
    axes = tuple(range(1, inp.ndim))
    intersect = jnp.sum(inp * target, axis=axes)
    union = jnp.sum(inp ** 2, axis=axes) + jnp.sum(target ** 2, axis=axes)
    dice = jnp.mean(1.0 - (2.0 * intersect + 1.0) / (union + 1.0))
    eps = 0.001
    xc = jnp.clip(inp, eps, 1.0 - eps)
    focal = -(target * (1.0 - xc) ** gamma * jnp.log(xc)
              + (1.0 - target) * xc ** gamma * jnp.log(1.0 - xc))
    return dice + jnp.mean(focal)


if __name__ == "__main__":
    key = jax.random.PRNGKey(0)
    k = jax.random.split(key, 6)

    def _check(shape, kx, kt, rtol=1e-5, atol=1e-5):
        x = jax.random.uniform(kx, shape, dtype=jnp.float32)
        t = (jax.random.uniform(kt, shape, dtype=jnp.float32) > 0.5)
        t = t.astype(jnp.float32)
        out = jax.block_until_ready(dice_and_focal_loss(x, t, gamma=2.0))
        ref = jax.block_until_ready(_reference(x, t, gamma=2.0))
        assert jnp.allclose(out, ref, rtol=rtol, atol=atol), (shape, out, ref)

    # Case 1: lane-aligned N (C*H*W = 1024), NCHW like the PyTorch module.
    _check((2, 4, 16, 16), k[0], k[1])
    # Case 2: non-128-aligned N -> analytic padding-correction path.
    _check((2, 3, 10, 10), k[2], k[3])
    # Case 3: larger aligned input -> exercises the in-kernel chunk loop.
    _check((2, 8, 128, 128), k[4], k[5], rtol=1e-4, atol=1e-4)

    print("KERNEL_OK")
</pallas_src>

<mosaic_0001>
module attributes {stable_mosaic.version = 11 : i64} {
  func.func @_dice_focal_kernel(%arg0: i32, %arg1: i32, %arg2: memref<2x8x128xf32, #tpu.memory_space<vmem>>, %arg3: memref<2x8x128xf32, #tpu.memory_space<vmem>>, %arg4: memref<1x2x8x128xf32, #tpu.memory_space<vmem>>, %arg5: memref<1x2x8x128xf32, #tpu.memory_space<vmem>>, %arg6: memref<1x2x8x128xf32, #tpu.memory_space<vmem>>) attributes {dimension_semantics = [#tpu.dimension_semantics<parallel>, #tpu.dimension_semantics<arbitrary>], iteration_bounds = array<i64: 1, 1>, scalar_prefetch = 0 : i64, scratch_operands = 0 : i64, tpu.core_type = #tpu.core_type<tc>, window_params = [{transform_indices = @transform_0, window_bounds = array<i64: 2, 8, 128>}, {transform_indices = @transform_1, window_bounds = array<i64: 2, 8, 128>}, {transform_indices = @transform_2, window_bounds = array<i64: 1, 2, 8, 128>}, {transform_indices = @transform_3, window_bounds = array<i64: 1, 2, 8, 128>}, {transform_indices = @transform_4, window_bounds = array<i64: 1, 2, 8, 128>}]} {
    %c0_i32 = arith.constant 0 : i32
    %0 = arith.cmpi eq, %arg1, %c0_i32 : i32
    %1 = arith.extui %0 : i1 to i32
    %c0_i32_0 = arith.constant 0 : i32
    %2 = arith.cmpi ne, %1, %c0_i32_0 : i32
    scf.if %2 {
      %cst_35 = arith.constant 0.000000e+00 : f32
      %48 = vector.broadcast %cst_35 : f32 to vector<1x2x8x128xf32>
      %c0_36 = arith.constant 0 : index
      %c0_37 = arith.constant 0 : index
      %c0_38 = arith.constant 0 : index
      %c0_39 = arith.constant 0 : index
      %49 = vector.load %arg4[%c0_36, %c0_37, %c0_38, %c0_39] : memref<1x2x8x128xf32, #tpu.memory_space<vmem>>, vector<1x2x8x128xf32>
      tpu.vector_store %arg4[%c0_36, %c0_37, %c0_38, %c0_39], %48 {strides = array<i32>} : memref<1x2x8x128xf32, #tpu.memory_space<vmem>>, vector<1x2x8x128xf32>,
      %cst_40 = arith.constant 0.000000e+00 : f32
      %50 = vector.broadcast %cst_40 : f32 to vector<1x2x8x128xf32>
      %c0_41 = arith.constant 0 : index
      %c0_42 = arith.constant 0 : index
      %c0_43 = arith.constant 0 : index
      %c0_44 = arith.constant 0 : index
      %51 = vector.load %arg5[%c0_41, %c0_42, %c0_43, %c0_44] : memref<1x2x8x128xf32, #tpu.memory_space<vmem>>, vector<1x2x8x128xf32>
      tpu.vector_store %arg5[%c0_41, %c0_42, %c0_43, %c0_44], %50 {strides = array<i32>} : memref<1x2x8x128xf32, #tpu.memory_space<vmem>>, vector<1x2x8x128xf32>,
      %cst_45 = arith.constant 0.000000e+00 : f32
      %52 = vector.broadcast %cst_45 : f32 to vector<1x2x8x128xf32>
      %c0_46 = arith.constant 0 : index
      %c0_47 = arith.constant 0 : index
      %c0_48 = arith.constant 0 : index
      %c0_49 = arith.constant 0 : index
      %53 = vector.load %arg6[%c0_46, %c0_47, %c0_48, %c0_49] : memref<1x2x8x128xf32, #tpu.memory_space<vmem>>, vector<1x2x8x128xf32>
      tpu.vector_store %arg6[%c0_46, %c0_47, %c0_48, %c0_49], %52 {strides = array<i32>} : memref<1x2x8x128xf32, #tpu.memory_space<vmem>>, vector<1x2x8x128xf32>,
    } else {
    }
    %c0 = arith.constant 0 : index
    %c0_1 = arith.constant 0 : index
    %c0_2 = arith.constant 0 : index
    %3 = vector.load %arg2[%c0, %c0_1, %c0_2] : memref<2x8x128xf32, #tpu.memory_space<vmem>>, vector<2x8x128xf32>
    %c0_3 = arith.constant 0 : index
    %c0_4 = arith.constant 0 : index
    %c0_5 = arith.constant 0 : index
    %4 = vector.load %arg3[%c0_3, %c0_4, %c0_5] : memref<2x8x128xf32, #tpu.memory_space<vmem>>, vector<2x8x128xf32>
    %5 = arith.mulf %3, %4 : vector<2x8x128xf32>
    %6 = arith.mulf %3, %3 : vector<2x8x128xf32>
    %7 = arith.mulf %4, %4 : vector<2x8x128xf32>
    %8 = arith.addf %6, %7 : vector<2x8x128xf32>
    %cst = arith.constant 1.000000e-03 : f32
    %cst_6 = arith.constant 9.990000e-01 : f32
    %9 = vector.broadcast %cst : f32 to vector<2x8x128xf32>
    %10 = arith.maximumf %9, %3 : vector<2x8x128xf32>
    %11 = vector.broadcast %cst_6 : f32 to vector<2x8x128xf32>
    %12 = arith.minimumf %11, %10 : vector<2x8x128xf32>
    %cst_7 = arith.constant 1.000000e+00 : f32
    %13 = vector.broadcast %cst_7 : f32 to vector<2x8x128xf32>
    %14 = arith.subf %13, %12 : vector<2x8x128xf32>
    %15 = math.log %12 : vector<2x8x128xf32>
    %16 = math.log %14 : vector<2x8x128xf32>
    %17 = arith.mulf %14, %14 : vector<2x8x128xf32>
    %18 = arith.mulf %12, %12 : vector<2x8x128xf32>
    %19 = arith.mulf %17, %15 : vector<2x8x128xf32>
    %20 = arith.mulf %18, %16 : vector<2x8x128xf32>
    %21 = arith.subf %19, %20 : vector<2x8x128xf32>
    %22 = arith.mulf %4, %21 : vector<2x8x128xf32>
    %23 = arith.addf %20, %22 : vector<2x8x128xf32>
    %c0_8 = arith.constant 0 : index
    %c0_9 = arith.constant 0 : index
    %c0_10 = arith.constant 0 : index
    %c0_11 = arith.constant 0 : index
    %24 = vector.load %arg4[%c0_8, %c0_9, %c0_10, %c0_11] : memref<1x2x8x128xf32, #tpu.memory_space<vmem>>, vector<1x2x8x128xf32>
    %25 = vector.shape_cast %24 : vector<1x2x8x128xf32> to vector<2x8x128xf32>
    %26 = vector.shape_cast %5 : vector<2x8x128xf32> to vector<2x1x8x128xf32>
    %cst_12 = arith.constant dense<0.000000e+00> : vector<2x8x128xf32>
    %27 = vector.multi_reduction <add>, %26, %cst_12 [1] : vector<2x1x8x128xf32> to vector<2x8x128xf32>
    %28 = arith.addf %25, %27 : vector<2x8x128xf32>
    %c0_13 = arith.constant 0 : index
    %c0_14 = arith.constant 0 : index
    %c0_15 = arith.constant 0 : index
    %c0_16 = arith.constant 0 : index
    %29 = vector.load %arg4[%c0_13, %c0_14, %c0_15, %c0_16] : memref<1x2x8x128xf32, #tpu.memory_space<vmem>>, vector<1x2x8x128xf32>
    %30 = vector.shape_cast %29 : vector<1x2x8x128xf32> to vector<2x8x128xf32>
    %31 = vector.shape_cast %28 : vector<2x8x128xf32> to vector<1x2x8x128xf32>
    tpu.vector_store %arg4[%c0_13, %c0_14, %c0_15, %c0_16], %31 {strides = array<i32>} : memref<1x2x8x128xf32, #tpu.memory_space<vmem>>, vector<1x2x8x128xf32>,
    %c0_17 = arith.constant 0 : index
    %c0_18 = arith.constant 0 : index
    %c0_19 = arith.constant 0 : index
    %c0_20 = arith.constant 0 : index
    %32 = vector.load %arg5[%c0_17, %c0_18, %c0_19, %c0_20] : memref<1x2x8x128xf32, #tpu.memory_space<vmem>>, vector<1x2x8x128xf32>
    %33 = vector.shape_cast %32 : vector<1x2x8x128xf32> to vector<2x8x128xf32>
    %34 = vector.shape_cast %8 : vector<2x8x128xf32> to vector<2x1x8x128xf32>
    %cst_21 = arith.constant dense<0.000000e+00> : vector<2x8x128xf32>
    %35 = vector.multi_reduction <add>, %34, %cst_21 [1] : vector<2x1x8x128xf32> to vector<2x8x128xf32>
    %36 = arith.addf %33, %35 : vector<2x8x128xf32>
    %c0_22 = arith.constant 0 : index
    %c0_23 = arith.constant 0 : index
    %c0_24 = arith.constant 0 : index
    %c0_25 = arith.constant 0 : index
    %37 = vector.load %arg5[%c0_22, %c0_23, %c0_24, %c0_25] : memref<1x2x8x128xf32, #tpu.memory_space<vmem>>, vector<1x2x8x128xf32>
    %38 = vector.shape_cast %37 : vector<1x2x8x128xf32> to vector<2x8x128xf32>
    %39 = vector.shape_cast %36 : vector<2x8x128xf32> to vector<1x2x8x128xf32>
    tpu.vector_store %arg5[%c0_22, %c0_23, %c0_24, %c0_25], %39 {strides = array<i32>} : memref<1x2x8x128xf32, #tpu.memory_space<vmem>>, vector<1x2x8x128xf32>,
    %c0_26 = arith.constant 0 : index
    %c0_27 = arith.constant 0 : index
    %c0_28 = arith.constant 0 : index
    %c0_29 = arith.constant 0 : index
    %40 = vector.load %arg6[%c0_26, %c0_27, %c0_28, %c0_29] : memref<1x2x8x128xf32, #tpu.memory_space<vmem>>, vector<1x2x8x128xf32>
    %41 = vector.shape_cast %40 : vector<1x2x8x128xf32> to vector<2x8x128xf32>
    %42 = vector.shape_cast %23 : vector<2x8x128xf32> to vector<2x1x8x128xf32>
    %cst_30 = arith.constant dense<0.000000e+00> : vector<2x8x128xf32>
    %43 = vector.multi_reduction <add>, %42, %cst_30 [1] : vector<2x1x8x128xf32> to vector<2x8x128xf32>
    %44 = arith.addf %41, %43 : vector<2x8x128xf32>
    %c0_31 = arith.constant 0 : index
    %c0_32 = arith.constant 0 : index
    %c0_33 = arith.constant 0 : index
    %c0_34 = arith.constant 0 : index
    %45 = vector.load %arg6[%c0_31, %c0_32, %c0_33, %c0_34] : memref<1x2x8x128xf32, #tpu.memory_space<vmem>>, vector<1x2x8x128xf32>
    %46 = vector.shape_cast %45 : vector<1x2x8x128xf32> to vector<2x8x128xf32>
    %47 = vector.shape_cast %44 : vector<2x8x128xf32> to vector<1x2x8x128xf32>
    tpu.vector_store %arg6[%c0_31, %c0_32, %c0_33, %c0_34], %47 {strides = array<i32>} : memref<1x2x8x128xf32, #tpu.memory_space<vmem>>, vector<1x2x8x128xf32>,
    return
  }
  func.func @transform_0(%arg0: i32, %arg1: i32) -> (i32, i32, i32) {
    %c1_i32 = arith.constant 1 : i32
    %0 = arith.muli %arg0, %c1_i32 : i32
    %1 = arith.addi %0, %arg1 : i32
    %c0_i32 = arith.constant 0 : i32
    %2 = arith.minsi %1, %c0_i32 : i32
    %c0_i32_0 = arith.constant 0 : i32
    %c0_i32_1 = arith.constant 0 : i32
    %c0_i32_2 = arith.constant 0 : i32
    return %c0_i32_0, %2, %c0_i32_1 : i32, i32, i32
  }
  func.func @transform_1(%arg0: i32, %arg1: i32) -> (i32, i32, i32) {
    %c1_i32 = arith.constant 1 : i32
    %0 = arith.muli %arg0, %c1_i32 : i32
    %1 = arith.addi %0, %arg1 : i32
    %c0_i32 = arith.constant 0 : i32
    %2 = arith.minsi %1, %c0_i32 : i32
    %c0_i32_0 = arith.constant 0 : i32
    %c0_i32_1 = arith.constant 0 : i32
    %c0_i32_2 = arith.constant 0 : i32
    return %c0_i32_0, %2, %c0_i32_1 : i32, i32, i32
  }
  func.func @transform_2(%arg0: i32, %arg1: i32) -> (i32, i32, i32, i32) {
    %c0_i32 = arith.constant 0 : i32
    %c0_i32_0 = arith.constant 0 : i32
    %c0_i32_1 = arith.constant 0 : i32
    %c0_i32_2 = arith.constant 0 : i32
    return %arg0, %c0_i32, %c0_i32_0, %c0_i32_1 : i32, i32, i32, i32
  }
  func.func @transform_3(%arg0: i32, %arg1: i32) -> (i32, i32, i32, i32) {
    %c0_i32 = arith.constant 0 : i32
    %c0_i32_0 = arith.constant 0 : i32
    %c0_i32_1 = arith.constant 0 : i32
    %c0_i32_2 = arith.constant 0 : i32
    return %arg0, %c0_i32, %c0_i32_0, %c0_i32_1 : i32, i32, i32, i32
  }
  func.func @transform_4(%arg0: i32, %arg1: i32) -> (i32, i32, i32, i32) {
    %c0_i32 = arith.constant 0 : i32
    %c0_i32_0 = arith.constant 0 : i32
    %c0_i32_1 = arith.constant 0 : i32
    %c0_i32_2 = arith.constant 0 : i32
    return %arg0, %c0_i32, %c0_i32_0, %c0_i32_1 : i32, i32, i32, i32
  }
}

</mosaic_0001>

<llo_original>
// kernel: tpu_custom_call.1
$region0: #{tpu_custom_call.1}
  #allocation0 [shape = 'u32[]', space=smem, size = 0x4, offset = 0x4, fixed_abs, tag = 'smem constant byte address 0x4 - core index']
  #allocation1 [shape = 'u32[144,128]{1,0:T(1,128)}', space=vmem, size = 0x12000, scoped, tag = 'internal scratch']
  %s0 = inlined_call_operand.hbm [shape: f32[2,8,128], index: 0, kind: input, shape index: {}]
  %s1 = inlined_call_operand.hbm [shape: f32[2,8,128], index: 1, kind: input, shape index: {}]
  %s2 = inlined_call_operand.hbm [shape: f32[1,2,8,128], index: 2, kind: output, shape index: {0}]
  %s3 = inlined_call_operand.hbm [shape: f32[1,2,8,128], index: 3, kind: output, shape index: {1}]
  %s4 = inlined_call_operand.hbm [shape: f32[1,2,8,128], index: 4, kind: output, shape index: {2}]
  %5 = xla_tuple %s2, %s3, %s4
  %s6 = sld [smem:[#allocation0]]
  $region46: #{tpu_custom_call.1} parent=0
    _
  %s8 = ssub.s32 1, %s6
  %s9 = scalar_select 0, %s8, %s6
  $region1: #{tpu_custom_call.1} parent=0
    #allocation2 [shape = 'u8[8192]{0}', space=vmem, size = 0x2000, scoped, tag = 'input window, operand 0, single buffered']
    #allocation3 [shape = 's32[1]{0}', space=sflag, size = 0x4, scoped, tag = 'scoped memory for tpu_custom_call.1']
    #allocation4 [shape = 's32[1]{0}', space=sflag, size = 0x4, scoped, tag = 'scoped memory for tpu_custom_call.1']
    #allocation5 [shape = 'u8[8192]{0}', space=vmem, size = 0x2000, scoped, tag = 'input window, operand 1, single buffered']
    #allocation6 [shape = 's32[1]{0}', space=sflag, size = 0x4, scoped, tag = 'scoped memory for tpu_custom_call.1']
    #allocation7 [shape = 'u8[8192]{0}', space=vmem, size = 0x2000, scoped, tag = 'output window, operand 0, single buffered']
    #allocation8 [shape = 'u8[8192]{0}', space=vmem, size = 0x2000, scoped, tag = 'output window, operand 1, single buffered']
    #allocation9 [shape = 's32[1]{0}', space=sflag, size = 0x4, scoped, tag = 'scoped memory for tpu_custom_call.1']
    #allocation10 [shape = 'u8[8192]{0}', space=vmem, size = 0x2000, scoped, tag = 'output window, operand 2, single buffered']
    %10 = vsyncpa [#allocation3], 0
    %11 = vsyncpa [#allocation6], 0
    %12 = vsyncpa [#allocation4], 0
    %13 = vsyncpa [#allocation9], 0
    // Predicated region
    $region2: #{tpu_custom_call.1} parent=1 // pred_check
      _
    $region3: #{tpu_custom_call.1} parent=1 // pred_check_branch
      %15 = sbr.rel (0) target = $region5
    $region4: #{tpu_custom_call.1} parent=1 // pred_region
      %s16 = sadd.s32 0, 0
      %p17 = scmp.lt.s32.totalorder %s16, 0
      %s18 = scalar_select %p17, %s16, 0
      %s20 = ssub.s32 256, 256
      %21 = vsyncadd [#allocation3], %s20
      %s22 = smul.addr %s18, 128
      %s23 = scalar_lea.hbm %s0, %s22
      %s24 = sshll.u32 [#allocation2], 4
      %s25 = int_to_ptr.vmem [resolvable:$true] %s24
      %30 = dma.hbm_to_vmem [thread:$0]  %s23, 256, %s25, [#allocation3], 128, 128, 8
    $region5: #{tpu_custom_call.1} parent=1 // pred_fallthru
      _
    // Predicated region
    $region6: #{tpu_custom_call.1} parent=1 // pred_check
      _
    $region7: #{tpu_custom_call.1} parent=1 // pred_check_branch
      %32 = sbr.rel (0) target = $region9
    $region8: #{tpu_custom_call.1} parent=1 // pred_region
      %s33 = sadd.s32 0, 0
      %p34 = scmp.lt.s32.totalorder %s33, 0
      %s35 = scalar_select %p34, %s33, 0
      %s37 = ssub.s32 256, 256
      %38 = vsyncadd [#allocation6], %s37
      %s39 = smul.addr %s35, 128
      %s40 = scalar_lea.hbm %s1, %s39
      %s41 = sshll.u32 [#allocation5], 4
      %s42 = int_to_ptr.vmem [resolvable:$true] %s41
      %47 = dma.hbm_to_vmem [thread:$0]  %s40, 256, %s42, [#allocation6], 128, 128, 8
    $region9: #{tpu_custom_call.1} parent=1 // pred_fallthru
      _
    // Predicated region
    $region10: #{tpu_custom_call.1} parent=1 // pred_check
      _
    $region11: #{tpu_custom_call.1} parent=1 // pred_check_branch
      %49 = sbr.rel (0) target = $region13
    $region12: #{tpu_custom_call.1} parent=1 // pred_region
      %50 = dma.done [#allocation3], 256
    $region13: #{tpu_custom_call.1} parent=1 // pred_fallthru
      _
    // Predicated region
    $region14: #{tpu_custom_call.1} parent=1 // pred_check
      _
    $region15: #{tpu_custom_call.1} parent=1 // pred_check_branch
      %52 = sbr.rel (0) target = $region17
    $region16: #{tpu_custom_call.1} parent=1 // pred_region
      %53 = dma.done [#allocation6], 256
    $region17: #{tpu_custom_call.1} parent=1 // pred_fallthru
      _
    %s54 = sadd.s32 0, 0
    %p55 = scmp.lt.s32.totalorder %s54, 0
    %s56 = scalar_select %p55, %s54, 0
    %s57 = sadd.s32 0, 0
    %p58 = scmp.lt.s32.totalorder %s57, 0
    %s59 = scalar_select %p58, %s57, 0
    %p60 = scmp.eq.s32.totalorder 0, 0
    // Predicated region
    $region18: #{tpu_custom_call.1} parent=1 // pred_check
      %p61 = pneg %p60
    $region19: #{tpu_custom_call.1} parent=1 // pred_check_branch
      %63 = sbr.rel (%p61) target = $region21
    $region20: #{tpu_custom_call.1} parent=1 // pred_region
      %64 = vst [vmem:[#allocation7] sm:$0xff] 0.0
      %65 = vst [vmem:[#allocation7 + $0x8] sm:$0xff] 0.0
      %66 = vst [vmem:[#allocation8] sm:$0xff] 0.0
      %67 = vst [vmem:[#allocation8 + $0x8] sm:$0xff] 0.0
      %68 = vst [vmem:[#allocation10] sm:$0xff] 0.0
      %69 = vst [vmem:[#allocation10 + $0x8] sm:$0xff] 0.0
    $region21: #{tpu_custom_call.1} parent=1 // pred_fallthru
      _
    %v70 = vld [vmem:[#allocation2] sm:$0xff]
    %v71 = vld [vmem:[#allocation2 + $0x8] sm:$0xff]
    %v72 = vld [vmem:[#allocation5] sm:$0xff]
    %v73 = vld [vmem:[#allocation5 + $0x8] sm:$0xff]
    %v74 = vmul.f32 %v70, %v72
    %v75 = vmul.f32 %v71, %v73
    %v76 = vmul.f32 %v70, %v70
    %v77 = vmul.f32 %v71, %v71
    %v78 = vmul.f32 %v72, %v72
    %v79 = vmul.f32 %v73, %v73
    %v80 = vadd.f32 %v76, %v78
    %v81 = vadd.f32 %v77, %v79
    %v82 = vmax.f32 %v70, 0.001
    %v83 = vmax.f32 %v71, 0.001
    %v84 = vmin.f32 %v82, 0.999
    %v85 = vmin.f32 %v83, 0.999
    %v86 = vsub.f32 1.0, %v84
    %v87 = vsub.f32 1.0, %v85
    %v88 = vlog2.pop %v84
    %v89 = vmul.f32 %v88, 0.6931472
    %v90 = vlog2.pop %v85
    %v91 = vmul.f32 %v90, 0.6931472
    %v92 = vlog2.pop %v86
    %v93 = vmul.f32 %v92, 0.6931472
    %v94 = vlog2.pop %v87
    %v95 = vmul.f32 %v94, 0.6931472
    %v96 = vmul.f32 %v86, %v86
    %v97 = vmul.f32 %v87, %v87
    %v98 = vmul.f32 %v84, %v84
    %v99 = vmul.f32 %v85, %v85
    %v100 = vmul.f32 %v96, %v89
    %v101 = vmul.f32 %v97, %v91
    %v102 = vmul.f32 %v98, %v93
    %v103 = vmul.f32 %v99, %v95
    %v104 = vsub.f32 %v100, %v102
    %v105 = vsub.f32 %v101, %v103
    %v106 = vmul.f32 %v72, %v104
    %v107 = vmul.f32 %v73, %v105
    %v108 = vadd.f32 %v102, %v106
    %v109 = vadd.f32 %v103, %v107
    %v110 = vld [vmem:[#allocation7] sm:$0xff]
    %v111 = vld [vmem:[#allocation7 + $0x8] sm:$0xff]
    %v112 = vadd.f32 %v74, 0.0
    %v113 = vadd.f32 %v75, 0.0
    %v114 = vadd.f32 %v110, %v112
    %v115 = vadd.f32 %v111, %v113
    %116 = vst [vmem:[#allocation7] sm:$0xff] %v114
    %117 = vst [vmem:[#allocation7 + $0x8] sm:$0xff] %v115
    %v118 = vld [vmem:[#allocation8] sm:$0xff]
    %v119 = vld [vmem:[#allocation8 + $0x8] sm:$0xff]
    %v120 = vadd.f32 %v80, 0.0
    %v121 = vadd.f32 %v81, 0.0
    %v122 = vadd.f32 %v118, %v120
    %v123 = vadd.f32 %v119, %v121
    %124 = vst [vmem:[#allocation8] sm:$0xff] %v122
    %125 = vst [vmem:[#allocation8 + $0x8] sm:$0xff] %v123
    %v126 = vld [vmem:[#allocation10] sm:$0xff]
    %v127 = vld [vmem:[#allocation10 + $0x8] sm:$0xff]
    %v128 = vadd.f32 %v108, 0.0
    %v129 = vadd.f32 %v109, 0.0
    %v130 = vadd.f32 %v126, %v128
    %v131 = vadd.f32 %v127, %v129
    %132 = vst [vmem:[#allocation10] sm:$0xff] %v130
    %133 = vst [vmem:[#allocation10 + $0x8] sm:$0xff] %v131
    // Predicated region
    $region22: #{tpu_custom_call.1} parent=1 // pred_check
      _
    $region23: #{tpu_custom_call.1} parent=1 // pred_check_branch
      %135 = sbr.rel (0) target = $region25
    $region24: #{tpu_custom_call.1} parent=1 // pred_region
      %s137 = ssub.s32 256, 256
      %138 = vsyncadd [#allocation4], %s137
      %s139 = sshll.u32 [#allocation7], 4
      %s140 = int_to_ptr.vmem [resolvable:$true] %s139
      %145 = dma.vmem_to_hbm [thread:$0]  %s140, 256, %s2, [#allocation4], 128, 128, 8
    $region25: #{tpu_custom_call.1} parent=1 // pred_fallthru
      _
    // Predicated region
    $region26: #{tpu_custom_call.1} parent=1 // pred_check
      _
    $region27: #{tpu_custom_call.1} parent=1 // pred_check_branch
      %147 = sbr.rel (0) target = $region29
    $region28: #{tpu_custom_call.1} parent=1 // pred_region
      %s149 = ssub.s32 256, 256
      %150 = vsyncadd [#allocation9], %s149
      %s151 = sshll.u32 [#allocation8], 4
      %s152 = int_to_ptr.vmem [resolvable:$true] %s151
      %157 = dma.vmem_to_hbm [thread:$0]  %s152, 256, %s3, [#allocation9], 128, 128, 8
    $region29: #{tpu_custom_call.1} parent=1 // pred_fallthru
      _
    // Predicated region
    $region30: #{tpu_custom_call.1} parent=1 // pred_check
      _
    $region31: #{tpu_custom_call.1} parent=1 // pred_check_branch
      %159 = sbr.rel (0) target = $region33
    $region32: #{tpu_custom_call.1} parent=1 // pred_region
      %s161 = ssub.s32 256, 256
      %162 = vsyncadd [#allocation9], %s161
      %s163 = sshll.u32 [#allocation10], 4
      %s164 = int_to_ptr.vmem [resolvable:$true] %s163
      %169 = dma.vmem_to_hbm [thread:$0]  %s164, 256, %s4, [#allocation9], 128, 128, 8
    $region33: #{tpu_custom_call.1} parent=1 // pred_fallthru
      _
    // Predicated region
    $region34: #{tpu_custom_call.1} parent=1 // pred_check
      _
    $region35: #{tpu_custom_call.1} parent=1 // pred_check_branch
      %171 = sbr.rel (0) target = $region37
    $region36: #{tpu_custom_call.1} parent=1 // pred_region
      %172 = dma.done [#allocation4], 256
    $region37: #{tpu_custom_call.1} parent=1 // pred_fallthru
      _
    // Predicated region
    $region38: #{tpu_custom_call.1} parent=1 // pred_check
      _
    $region39: #{tpu_custom_call.1} parent=1 // pred_check_branch
      %174 = sbr.rel (0) target = $region41
    $region40: #{tpu_custom_call.1} parent=1 // pred_region
      %175 = dma.done [#allocation9], 256
    $region41: #{tpu_custom_call.1} parent=1 // pred_fallthru
      _
    // Predicated region
    $region42: #{tpu_custom_call.1} parent=1 // pred_check
      _
    $region43: #{tpu_custom_call.1} parent=1 // pred_check_branch
      %177 = sbr.rel (0) target = $region45
    $region44: #{tpu_custom_call.1} parent=1 // pred_region
      %178 = dma.done [#allocation9], 256
    $region45: #{tpu_custom_call.1} parent=1 // pred_fallthru
      _
    %179 = vsyncpa [#allocation3], 1
    %180 = vsyncpa [#allocation6], 1
    %181 = vsyncpa [#allocation4], 1
    %182 = vsyncpa [#allocation9], 1

</llo_original>
